<compile_context>
chip_gen: v5e
topology: v5e:2x2
jax: 0.10.0
libtpu: 0.0.40
codegen_flags: <defaults>
</compile_context>

<pallas_src>
import jax
import jax.numpy as jnp
from jax.experimental import pallas as pl
from jax.experimental.pallas import tpu as pltpu


# ---------------------------------------------------------------------------
# Trace-time VMEM budgeting helpers.
# ---------------------------------------------------------------------------

def _vmem_budget_bytes():
    """Per-step VMEM budget, safe under every generation's default scoped limit
    (v5e: 16 MiB scoped, v6e/v7x: 32 MiB scoped, v7x physical: 64 MiB)."""
    try:
        cap = pltpu.get_tpu_info().vmem_capacity_bytes
    except Exception:
        cap = 64 << 20  # assume the smallest (v7x) physical VMEM
    return min(12 << 20, cap // 6)


def _pick_lane_tile(HW, per_lane_bytes, fixed_bytes, budget):
    """Largest multiple-of-128 divisor of HW whose VMEM footprint fits budget."""
    def footprint(t):
        return per_lane_bytes * t + fixed_bytes

    if footprint(HW) <= budget or HW % 128 != 0:
        # Whole extent: either it is small, or HW is ragged and only the
        # full-extent block satisfies the (8, 128) layout rule.
        return HW
    best = 128
    t = 128
    while t <= HW:
        if HW % t == 0 and footprint(t) <= budget:
            best = t
        t += 128
    return best


# ---------------------------------------------------------------------------
# Tiny-C path (C < 8): unrolled VPU channel mix, weights/bias in SMEM.
# ---------------------------------------------------------------------------

def _make_small_c_kernel(C, bn):
    def kernel(x_ref, w_ref, b_ref, o_ref):
        # x_ref / o_ref: (bn*C, THW) VMEM, row j*C + c <-> (sample j, channel c).
        # w_ref: (C*C,) SMEM with w_ref[o*C + c] == W[o, c].   b_ref: (C,) SMEM.
        x = x_ref[...].astype(jnp.float32)
        for j in range(bn):
            base = j * C
            xs = [x[base + c, :] for c in range(C)]
            for o in range(C):
                acc = w_ref[o * C] * xs[0]
                for c in range(1, C):
                    acc = acc + w_ref[o * C + c] * xs[c]
                o_ref[base + o, :] = (acc + b_ref[o]).astype(o_ref.dtype)
    return kernel


def _conv1x1_small_c(x2, w_flat, b1, N, C, HW):
    """x2: (N*C, HW). Returns (N*C, HW) result, or None to fall back."""
    itemsize = x2.dtype.itemsize
    budget = _vmem_budget_bytes()

    # Lane tile (footprint for in + out, double-buffered, bn=1).
    thw = _pick_lane_tile(HW, per_lane_bytes=4 * C * itemsize,
                          fixed_bytes=0, budget=budget)

    # Batch packing: put as many samples as possible in one block (collapses
    # tiny problems like the test shape to a single grid step), while keeping
    # the unrolled VPU loop bounded and the sublane dim 8-aligned or full.
    max_unroll_bn = max(1, 128 // (C * C))
    bn = None
    for cand in range(min(N, max_unroll_bn), 0, -1):
        if N % cand != 0:
            continue
        rows = cand * C
        if rows % 8 != 0 and rows != N * C:
            continue  # would violate the (8, 128) block rule
        if 4 * rows * thw * itemsize > budget:
            continue
        bn = cand
        break
    if bn is None:
        return None  # let the caller use the general MXU path

    return pl.pallas_call(
        _make_small_c_kernel(C, bn),
        out_shape=jax.ShapeDtypeStruct((N * C, HW), x2.dtype),
        grid=(N // bn, HW // thw),
        in_specs=[
            pl.BlockSpec((bn * C, thw), lambda n, s: (n, s)),
            pl.BlockSpec(memory_space=pltpu.MemorySpace.SMEM),  # weight (C*C,)
            pl.BlockSpec(memory_space=pltpu.MemorySpace.SMEM),  # bias (C,)
        ],
        out_specs=pl.BlockSpec((bn * C, thw), lambda n, s: (n, s)),
        compiler_params=pltpu.CompilerParams(
            dimension_semantics=("parallel", "parallel")),
    )(x2, w_flat, b1)


# ---------------------------------------------------------------------------
# General path (C >= 8): MXU matmul over lane tiles.
# ---------------------------------------------------------------------------

def _mxu_kernel(x_ref, w_ref, b_ref, o_ref):
    # x_ref: (C, THW)  w_ref: (C, C)  b_ref: (C, THW)  o_ref: (C, THW)
    y = jnp.dot(w_ref[...], x_ref[...], preferred_element_type=jnp.float32)
    o_ref[...] = (y + b_ref[...]).astype(o_ref.dtype)


def _conv1x1_mxu(x3, w2, bias):
    """x3: (N, C, HW). Returns (N, C, HW)."""
    N, C, HW = x3.shape
    itemsize = x3.dtype.itemsize
    budget = _vmem_budget_bytes()

    # Per lane: double-buffered x & y tiles + resident bias tile; fixed: weight.
    per_lane = 2 * 2 * C * itemsize + 2 * C * 4
    fixed = 2 * C * C * itemsize
    thw = _pick_lane_tile(HW, per_lane, fixed, budget)

    # Bias pre-broadcast to the lane-tile width (resident across the grid).
    b2 = jnp.broadcast_to(bias.reshape(C, 1).astype(jnp.float32), (C, thw))

    # Note: for very large C (>= 512) one would additionally tile the output
    # channel dim (weight block (TCO, C), TCO aligned to the MXU tile); not
    # needed for the channel counts this module is used with.
    return pl.pallas_call(
        _mxu_kernel,
        out_shape=jax.ShapeDtypeStruct((N, C, HW), x3.dtype),
        grid=(N, HW // thw),
        in_specs=[
            pl.BlockSpec((None, C, thw), lambda n, s: (n, 0, s)),  # x tile
            pl.BlockSpec((C, C), lambda n, s: (0, 0)),             # resident W
            pl.BlockSpec((C, thw), lambda n, s: (0, 0)),           # resident bias
        ],
        out_specs=pl.BlockSpec((None, C, thw), lambda n, s: (n, 0, s)),
        compiler_params=pltpu.CompilerParams(
            dimension_semantics=("parallel", "parallel")),
    )(x3, w2, b2)


# ---------------------------------------------------------------------------
# Public entry point.
# ---------------------------------------------------------------------------

def conv1x1_forward(x, weight, bias):
    """x: (N, C, H, W); weight: (C, C, 1, 1); bias: (C,).
    Returns y == nn.Conv2d(C, C, kernel_size=1)(x) (PyTorch NCHW semantics)."""
    N, C, H, W = x.shape
    HW = H * W
    w2 = weight.reshape(C, C)  # free views; hoist to init time in a real model

    if C < 8:
        y2 = _conv1x1_small_c(x.reshape(N * C, HW),
                              w2.reshape(C * C).astype(jnp.float32),
                              bias.reshape(C).astype(jnp.float32),
                              N, C, HW)
        if y2 is not None:
            return y2.reshape(N, C, H, W)
    y3 = _conv1x1_mxu(x.reshape(N, C, HW), w2, bias)
    return y3.reshape(N, C, H, W)


if __name__ == "__main__":
    key = jax.random.PRNGKey(0)
    k_x, k_w, k_b = jax.random.split(key, 3)

    def run_case(N, C, H, W, atol, rtol):
        x = jax.random.normal(k_x, (N, C, H, W), dtype=jnp.float32)
        # PyTorch Conv2d default init bound: 1 / sqrt(C_in * kH * kW).
        bound = 1.0 / (C ** 0.5)
        weight = jax.random.uniform(k_w, (C, C, 1, 1), minval=-bound,
                                    maxval=bound, dtype=jnp.float32)
        bias = jax.random.uniform(k_b, (C,), minval=-bound, maxval=bound,
                                  dtype=jnp.float32)

        y = conv1x1_forward(x, weight, bias)
        jax.block_until_ready(y)

        y_ref = (jnp.einsum("oc,nchw->nohw", weight.reshape(C, C), x,
                            precision=jax.lax.Precision.HIGHEST)
                 + bias[None, :, None, None])
        assert y.shape == (N, C, H, W)
        assert jnp.allclose(y, y_ref, atol=atol, rtol=rtol), (N, C, H, W)

    # Module's nominal tiny shape: VPU/SMEM path, single grid step.
    run_case(2, 4, 16, 16, atol=1e-5, rtol=1e-5)
    # Wider channel count: exercises the lane-tiled MXU path
    # (looser tolerance to allow for MXU f32 pass precision).
    run_case(2, 32, 16, 16, atol=2e-2, rtol=2e-2)

    print("KERNEL_OK")
</pallas_src>

<mosaic_0001>
module attributes {stable_mosaic.version = 11 : i64} {
  func.func @kernel(%arg0: i32, %arg1: i32, %arg2: memref<8x256xf32, #tpu.memory_space<vmem>>, %arg3: memref<16xf32, #tpu.memory_space<smem>>, %arg4: memref<4xf32, #tpu.memory_space<smem>>, %arg5: memref<8x256xf32, #tpu.memory_space<vmem>>) attributes {dimension_semantics = [#tpu.dimension_semantics<parallel>, #tpu.dimension_semantics<parallel>], iteration_bounds = array<i64: 1, 1>, scalar_prefetch = 0 : i64, scratch_operands = 0 : i64, tpu.core_type = #tpu.core_type<tc>, window_params = [{transform_indices = @transform_0, window_bounds = array<i64: 8, 256>}, {transform_indices = @transform_1, window_bounds = array<i64: 16>}, {transform_indices = @transform_2, window_bounds = array<i64: 4>}, {transform_indices = @transform_3, window_bounds = array<i64: 8, 256>}]} {
    %c0 = arith.constant 0 : index
    %c0_0 = arith.constant 0 : index
    %0 = vector.load %arg2[%c0, %c0_0] : memref<8x256xf32, #tpu.memory_space<vmem>>, vector<8x256xf32>
    %1 = vector.extract_strided_slice %0 {offsets = [0, 0], sizes = [1, 256], strides = [1, 1]} : vector<8x256xf32> to vector<1x256xf32>
    %2 = vector.shape_cast %1 : vector<1x256xf32> to vector<256xf32>
    %3 = vector.extract_strided_slice %0 {offsets = [1, 0], sizes = [1, 256], strides = [1, 1]} : vector<8x256xf32> to vector<1x256xf32>
    %4 = vector.shape_cast %3 : vector<1x256xf32> to vector<256xf32>
    %5 = vector.extract_strided_slice %0 {offsets = [2, 0], sizes = [1, 256], strides = [1, 1]} : vector<8x256xf32> to vector<1x256xf32>
    %6 = vector.shape_cast %5 : vector<1x256xf32> to vector<256xf32>
    %7 = vector.extract_strided_slice %0 {offsets = [3, 0], sizes = [1, 256], strides = [1, 1]} : vector<8x256xf32> to vector<1x256xf32>
    %8 = vector.shape_cast %7 : vector<1x256xf32> to vector<256xf32>
    %c0_1 = arith.constant 0 : index
    %9 = memref.load %arg3[%c0_1] : memref<16xf32, #tpu.memory_space<smem>>
    %10 = vector.broadcast %9 : f32 to vector<256xf32>
    %11 = arith.mulf %10, %2 : vector<256xf32>
    %c1 = arith.constant 1 : index
    %12 = memref.load %arg3[%c1] : memref<16xf32, #tpu.memory_space<smem>>
    %13 = vector.broadcast %12 : f32 to vector<256xf32>
    %14 = arith.mulf %13, %4 : vector<256xf32>
    %15 = arith.addf %11, %14 : vector<256xf32>
    %c2 = arith.constant 2 : index
    %16 = memref.load %arg3[%c2] : memref<16xf32, #tpu.memory_space<smem>>
    %17 = vector.broadcast %16 : f32 to vector<256xf32>
    %18 = arith.mulf %17, %6 : vector<256xf32>
    %19 = arith.addf %15, %18 : vector<256xf32>
    %c3 = arith.constant 3 : index
    %20 = memref.load %arg3[%c3] : memref<16xf32, #tpu.memory_space<smem>>
    %21 = vector.broadcast %20 : f32 to vector<256xf32>
    %22 = arith.mulf %21, %8 : vector<256xf32>
    %23 = arith.addf %19, %22 : vector<256xf32>
    %c0_2 = arith.constant 0 : index
    %24 = memref.load %arg4[%c0_2] : memref<4xf32, #tpu.memory_space<smem>>
    %25 = vector.broadcast %24 : f32 to vector<256xf32>
    %26 = arith.addf %23, %25 : vector<256xf32>
    %c0_3 = arith.constant 0 : index
    %c0_4 = arith.constant 0 : index
    %27 = vector.load %arg5[%c0_3, %c0_4] : memref<8x256xf32, #tpu.memory_space<vmem>>, vector<1x256xf32>
    %28 = vector.shape_cast %27 : vector<1x256xf32> to vector<256xf32>
    %29 = vector.shape_cast %26 : vector<256xf32> to vector<1x256xf32>
    tpu.vector_store %arg5[%c0_3, %c0_4], %29 {strides = array<i32>} : memref<8x256xf32, #tpu.memory_space<vmem>>, vector<1x256xf32>,
    %c4 = arith.constant 4 : index
    %30 = memref.load %arg3[%c4] : memref<16xf32, #tpu.memory_space<smem>>
    %31 = vector.broadcast %30 : f32 to vector<256xf32>
    %32 = arith.mulf %31, %2 : vector<256xf32>
    %c5 = arith.constant 5 : index
    %33 = memref.load %arg3[%c5] : memref<16xf32, #tpu.memory_space<smem>>
    %34 = vector.broadcast %33 : f32 to vector<256xf32>
    %35 = arith.mulf %34, %4 : vector<256xf32>
    %36 = arith.addf %32, %35 : vector<256xf32>
    %c6 = arith.constant 6 : index
    %37 = memref.load %arg3[%c6] : memref<16xf32, #tpu.memory_space<smem>>
    %38 = vector.broadcast %37 : f32 to vector<256xf32>
    %39 = arith.mulf %38, %6 : vector<256xf32>
    %40 = arith.addf %36, %39 : vector<256xf32>
    %c7 = arith.constant 7 : index
    %41 = memref.load %arg3[%c7] : memref<16xf32, #tpu.memory_space<smem>>
    %42 = vector.broadcast %41 : f32 to vector<256xf32>
    %43 = arith.mulf %42, %8 : vector<256xf32>
    %44 = arith.addf %40, %43 : vector<256xf32>
    %c1_5 = arith.constant 1 : index
    %45 = memref.load %arg4[%c1_5] : memref<4xf32, #tpu.memory_space<smem>>
    %46 = vector.broadcast %45 : f32 to vector<256xf32>
    %47 = arith.addf %44, %46 : vector<256xf32>
    %c1_6 = arith.constant 1 : index
    %c0_7 = arith.constant 0 : index
    %48 = vector.load %arg5[%c1_6, %c0_7] : memref<8x256xf32, #tpu.memory_space<vmem>>, vector<1x256xf32>
    %49 = vector.shape_cast %48 : vector<1x256xf32> to vector<256xf32>
    %50 = vector.shape_cast %47 : vector<256xf32> to vector<1x256xf32>
    tpu.vector_store %arg5[%c1_6, %c0_7], %50 {strides = array<i32>} : memref<8x256xf32, #tpu.memory_space<vmem>>, vector<1x256xf32>,
    %c8 = arith.constant 8 : index
    %51 = memref.load %arg3[%c8] : memref<16xf32, #tpu.memory_space<smem>>
    %52 = vector.broadcast %51 : f32 to vector<256xf32>
    %53 = arith.mulf %52, %2 : vector<256xf32>
    %c9 = arith.constant 9 : index
    %54 = memref.load %arg3[%c9] : memref<16xf32, #tpu.memory_space<smem>>
    %55 = vector.broadcast %54 : f32 to vector<256xf32>
    %56 = arith.mulf %55, %4 : vector<256xf32>
    %57 = arith.addf %53, %56 : vector<256xf32>
    %c10 = arith.constant 10 : index
    %58 = memref.load %arg3[%c10] : memref<16xf32, #tpu.memory_space<smem>>
    %59 = vector.broadcast %58 : f32 to vector<256xf32>
    %60 = arith.mulf %59, %6 : vector<256xf32>
    %61 = arith.addf %57, %60 : vector<256xf32>
    %c11 = arith.constant 11 : index
    %62 = memref.load %arg3[%c11] : memref<16xf32, #tpu.memory_space<smem>>
    %63 = vector.broadcast %62 : f32 to vector<256xf32>
    %64 = arith.mulf %63, %8 : vector<256xf32>
    %65 = arith.addf %61, %64 : vector<256xf32>
    %c2_8 = arith.constant 2 : index
    %66 = memref.load %arg4[%c2_8] : memref<4xf32, #tpu.memory_space<smem>>
    %67 = vector.broadcast %66 : f32 to vector<256xf32>
    %68 = arith.addf %65, %67 : vector<256xf32>
    %c2_9 = arith.constant 2 : index
    %c0_10 = arith.constant 0 : index
    %69 = vector.load %arg5[%c2_9, %c0_10] : memref<8x256xf32, #tpu.memory_space<vmem>>, vector<1x256xf32>
    %70 = vector.shape_cast %69 : vector<1x256xf32> to vector<256xf32>
    %71 = vector.shape_cast %68 : vector<256xf32> to vector<1x256xf32>
    tpu.vector_store %arg5[%c2_9, %c0_10], %71 {strides = array<i32>} : memref<8x256xf32, #tpu.memory_space<vmem>>, vector<1x256xf32>,
    %c12 = arith.constant 12 : index
    %72 = memref.load %arg3[%c12] : memref<16xf32, #tpu.memory_space<smem>>
    %73 = vector.broadcast %72 : f32 to vector<256xf32>
    %74 = arith.mulf %73, %2 : vector<256xf32>
    %c13 = arith.constant 13 : index
    %75 = memref.load %arg3[%c13] : memref<16xf32, #tpu.memory_space<smem>>
    %76 = vector.broadcast %75 : f32 to vector<256xf32>
    %77 = arith.mulf %76, %4 : vector<256xf32>
    %78 = arith.addf %74, %77 : vector<256xf32>
    %c14 = arith.constant 14 : index
    %79 = memref.load %arg3[%c14] : memref<16xf32, #tpu.memory_space<smem>>
    %80 = vector.broadcast %79 : f32 to vector<256xf32>
    %81 = arith.mulf %80, %6 : vector<256xf32>
    %82 = arith.addf %78, %81 : vector<256xf32>
    %c15 = arith.constant 15 : index
    %83 = memref.load %arg3[%c15] : memref<16xf32, #tpu.memory_space<smem>>
    %84 = vector.broadcast %83 : f32 to vector<256xf32>
    %85 = arith.mulf %84, %8 : vector<256xf32>
    %86 = arith.addf %82, %85 : vector<256xf32>
    %c3_11 = arith.constant 3 : index
    %87 = memref.load %arg4[%c3_11] : memref<4xf32, #tpu.memory_space<smem>>
    %88 = vector.broadcast %87 : f32 to vector<256xf32>
    %89 = arith.addf %86, %88 : vector<256xf32>
    %c3_12 = arith.constant 3 : index
    %c0_13 = arith.constant 0 : index
    %90 = vector.load %arg5[%c3_12, %c0_13] : memref<8x256xf32, #tpu.memory_space<vmem>>, vector<1x256xf32>
    %91 = vector.shape_cast %90 : vector<1x256xf32> to vector<256xf32>
    %92 = vector.shape_cast %89 : vector<256xf32> to vector<1x256xf32>
    tpu.vector_store %arg5[%c3_12, %c0_13], %92 {strides = array<i32>} : memref<8x256xf32, #tpu.memory_space<vmem>>, vector<1x256xf32>,
    %93 = vector.extract_strided_slice %0 {offsets = [4, 0], sizes = [1, 256], strides = [1, 1]} : vector<8x256xf32> to vector<1x256xf32>
    %94 = vector.shape_cast %93 : vector<1x256xf32> to vector<256xf32>
    %95 = vector.extract_strided_slice %0 {offsets = [5, 0], sizes = [1, 256], strides = [1, 1]} : vector<8x256xf32> to vector<1x256xf32>
    %96 = vector.shape_cast %95 : vector<1x256xf32> to vector<256xf32>
    %97 = vector.extract_strided_slice %0 {offsets = [6, 0], sizes = [1, 256], strides = [1, 1]} : vector<8x256xf32> to vector<1x256xf32>
    %98 = vector.shape_cast %97 : vector<1x256xf32> to vector<256xf32>
    %99 = vector.extract_strided_slice %0 {offsets = [7, 0], sizes = [1, 256], strides = [1, 1]} : vector<8x256xf32> to vector<1x256xf32>
    %100 = vector.shape_cast %99 : vector<1x256xf32> to vector<256xf32>
    %c0_14 = arith.constant 0 : index
    %101 = memref.load %arg3[%c0_14] : memref<16xf32, #tpu.memory_space<smem>>
    %102 = vector.broadcast %101 : f32 to vector<256xf32>
    %103 = arith.mulf %102, %94 : vector<256xf32>
    %c1_15 = arith.constant 1 : index
    %104 = memref.load %arg3[%c1_15] : memref<16xf32, #tpu.memory_space<smem>>
    %105 = vector.broadcast %104 : f32 to vector<256xf32>
    %106 = arith.mulf %105, %96 : vector<256xf32>
    %107 = arith.addf %103, %106 : vector<256xf32>
    %c2_16 = arith.constant 2 : index
    %108 = memref.load %arg3[%c2_16] : memref<16xf32, #tpu.memory_space<smem>>
    %109 = vector.broadcast %108 : f32 to vector<256xf32>
    %110 = arith.mulf %109, %98 : vector<256xf32>
    %111 = arith.addf %107, %110 : vector<256xf32>
    %c3_17 = arith.constant 3 : index
    %112 = memref.load %arg3[%c3_17] : memref<16xf32, #tpu.memory_space<smem>>
    %113 = vector.broadcast %112 : f32 to vector<256xf32>
    %114 = arith.mulf %113, %100 : vector<256xf32>
    %115 = arith.addf %111, %114 : vector<256xf32>
    %c0_18 = arith.constant 0 : index
    %116 = memref.load %arg4[%c0_18] : memref<4xf32, #tpu.memory_space<smem>>
    %117 = vector.broadcast %116 : f32 to vector<256xf32>
    %118 = arith.addf %115, %117 : vector<256xf32>
    %c4_19 = arith.constant 4 : index
    %c0_20 = arith.constant 0 : index
    %119 = vector.load %arg5[%c4_19, %c0_20] : memref<8x256xf32, #tpu.memory_space<vmem>>, vector<1x256xf32>
    %120 = vector.shape_cast %119 : vector<1x256xf32> to vector<256xf32>
    %121 = vector.shape_cast %118 : vector<256xf32> to vector<1x256xf32>
    tpu.vector_store %arg5[%c4_19, %c0_20], %121 {strides = array<i32>} : memref<8x256xf32, #tpu.memory_space<vmem>>, vector<1x256xf32>,
    %c4_21 = arith.constant 4 : index
    %122 = memref.load %arg3[%c4_21] : memref<16xf32, #tpu.memory_space<smem>>
    %123 = vector.broadcast %122 : f32 to vector<256xf32>
    %124 = arith.mulf %123, %94 : vector<256xf32>
    %c5_22 = arith.constant 5 : index
    %125 = memref.load %arg3[%c5_22] : memref<16xf32, #tpu.memory_space<smem>>
    %126 = vector.broadcast %125 : f32 to vector<256xf32>
    %127 = arith.mulf %126, %96 : vector<256xf32>
    %128 = arith.addf %124, %127 : vector<256xf32>
    %c6_23 = arith.constant 6 : index
    %129 = memref.load %arg3[%c6_23] : memref<16xf32, #tpu.memory_space<smem>>
    %130 = vector.broadcast %129 : f32 to vector<256xf32>
    %131 = arith.mulf %130, %98 : vector<256xf32>
    %132 = arith.addf %128, %131 : vector<256xf32>
    %c7_24 = arith.constant 7 : index
    %133 = memref.load %arg3[%c7_24] : memref<16xf32, #tpu.memory_space<smem>>
    %134 = vector.broadcast %133 : f32 to vector<256xf32>
    %135 = arith.mulf %134, %100 : vector<256xf32>
    %136 = arith.addf %132, %135 : vector<256xf32>
    %c1_25 = arith.constant 1 : index
    %137 = memref.load %arg4[%c1_25] : memref<4xf32, #tpu.memory_space<smem>>
    %138 = vector.broadcast %137 : f32 to vector<256xf32>
    %139 = arith.addf %136, %138 : vector<256xf32>
    %c5_26 = arith.constant 5 : index
    %c0_27 = arith.constant 0 : index
    %140 = vector.load %arg5[%c5_26, %c0_27] : memref<8x256xf32, #tpu.memory_space<vmem>>, vector<1x256xf32>
    %141 = vector.shape_cast %140 : vector<1x256xf32> to vector<256xf32>
    %142 = vector.shape_cast %139 : vector<256xf32> to vector<1x256xf32>
    tpu.vector_store %arg5[%c5_26, %c0_27], %142 {strides = array<i32>} : memref<8x256xf32, #tpu.memory_space<vmem>>, vector<1x256xf32>,
    %c8_28 = arith.constant 8 : index
    %143 = memref.load %arg3[%c8_28] : memref<16xf32, #tpu.memory_space<smem>>
    %144 = vector.broadcast %143 : f32 to vector<256xf32>
    %145 = arith.mulf %144, %94 : vector<256xf32>
    %c9_29 = arith.constant 9 : index
    %146 = memref.load %arg3[%c9_29] : memref<16xf32, #tpu.memory_space<smem>>
    %147 = vector.broadcast %146 : f32 to vector<256xf32>
    %148 = arith.mulf %147, %96 : vector<256xf32>
    %149 = arith.addf %145, %148 : vector<256xf32>
    %c10_30 = arith.constant 10 : index
    %150 = memref.load %arg3[%c10_30] : memref<16xf32, #tpu.memory_space<smem>>
    %151 = vector.broadcast %150 : f32 to vector<256xf32>
    %152 = arith.mulf %151, %98 : vector<256xf32>
    %153 = arith.addf %149, %152 : vector<256xf32>
    %c11_31 = arith.constant 11 : index
    %154 = memref.load %arg3[%c11_31] : memref<16xf32, #tpu.memory_space<smem>>
    %155 = vector.broadcast %154 : f32 to vector<256xf32>
    %156 = arith.mulf %155, %100 : vector<256xf32>
    %157 = arith.addf %153, %156 : vector<256xf32>
    %c2_32 = arith.constant 2 : index
    %158 = memref.load %arg4[%c2_32] : memref<4xf32, #tpu.memory_space<smem>>
    %159 = vector.broadcast %158 : f32 to vector<256xf32>
    %160 = arith.addf %157, %159 : vector<256xf32>
    %c6_33 = arith.constant 6 : index
    %c0_34 = arith.constant 0 : index
    %161 = vector.load %arg5[%c6_33, %c0_34] : memref<8x256xf32, #tpu.memory_space<vmem>>, vector<1x256xf32>
    %162 = vector.shape_cast %161 : vector<1x256xf32> to vector<256xf32>
    %163 = vector.shape_cast %160 : vector<256xf32> to vector<1x256xf32>
    tpu.vector_store %arg5[%c6_33, %c0_34], %163 {strides = array<i32>} : memref<8x256xf32, #tpu.memory_space<vmem>>, vector<1x256xf32>,
    %c12_35 = arith.constant 12 : index
    %164 = memref.load %arg3[%c12_35] : memref<16xf32, #tpu.memory_space<smem>>
    %165 = vector.broadcast %164 : f32 to vector<256xf32>
    %166 = arith.mulf %165, %94 : vector<256xf32>
    %c13_36 = arith.constant 13 : index
    %167 = memref.load %arg3[%c13_36] : memref<16xf32, #tpu.memory_space<smem>>
    %168 = vector.broadcast %167 : f32 to vector<256xf32>
    %169 = arith.mulf %168, %96 : vector<256xf32>
    %170 = arith.addf %166, %169 : vector<256xf32>
    %c14_37 = arith.constant 14 : index
    %171 = memref.load %arg3[%c14_37] : memref<16xf32, #tpu.memory_space<smem>>
    %172 = vector.broadcast %171 : f32 to vector<256xf32>
    %173 = arith.mulf %172, %98 : vector<256xf32>
    %174 = arith.addf %170, %173 : vector<256xf32>
    %c15_38 = arith.constant 15 : index
    %175 = memref.load %arg3[%c15_38] : memref<16xf32, #tpu.memory_space<smem>>
    %176 = vector.broadcast %175 : f32 to vector<256xf32>
    %177 = arith.mulf %176, %100 : vector<256xf32>
    %178 = arith.addf %174, %177 : vector<256xf32>
    %c3_39 = arith.constant 3 : index
    %179 = memref.load %arg4[%c3_39] : memref<4xf32, #tpu.memory_space<smem>>
    %180 = vector.broadcast %179 : f32 to vector<256xf32>
    %181 = arith.addf %178, %180 : vector<256xf32>
    %c7_40 = arith.constant 7 : index
    %c0_41 = arith.constant 0 : index
    %182 = vector.load %arg5[%c7_40, %c0_41] : memref<8x256xf32, #tpu.memory_space<vmem>>, vector<1x256xf32>
    %183 = vector.shape_cast %182 : vector<1x256xf32> to vector<256xf32>
    %184 = vector.shape_cast %181 : vector<256xf32> to vector<1x256xf32>
    tpu.vector_store %arg5[%c7_40, %c0_41], %184 {strides = array<i32>} : memref<8x256xf32, #tpu.memory_space<vmem>>, vector<1x256xf32>,
    return
  }
  func.func @transform_0(%arg0: i32, %arg1: i32) -> (i32, i32) {
    %c0_i32 = arith.constant 0 : i32
    return %arg0, %arg1 : i32, i32
  }
  func.func @transform_1(%arg0: i32, %arg1: i32) -> i32 {
    %c0_i32 = arith.constant 0 : i32
    %c0_i32_0 = arith.constant 0 : i32
    return %c0_i32 : i32
  }
  func.func @transform_2(%arg0: i32, %arg1: i32) -> i32 {
    %c0_i32 = arith.constant 0 : i32
    %c0_i32_0 = arith.constant 0 : i32
    return %c0_i32 : i32
  }
  func.func @transform_3(%arg0: i32, %arg1: i32) -> (i32, i32) {
    %c0_i32 = arith.constant 0 : i32
    return %arg0, %arg1 : i32, i32
  }
}

</mosaic_0001>

<llo_original>
// kernel: tpu_custom_call.1
$region0: #{tpu_custom_call.1}
  #allocation0 [shape = 'u32[]', space=smem, size = 0x4, offset = 0x4, fixed_abs, tag = 'smem constant byte address 0x4 - core index']
  #allocation1 [shape = 'u32[72,128]{1,0:T(1,128)}', space=vmem, size = 0x9000, scoped, tag = 'internal scratch']
  %s0 = inlined_call_operand.hbm [shape: f32[8,256], index: 0, kind: input, shape index: {}]
  %s1 = inlined_call_operand.hbm [shape: f32[16], index: 1, kind: input, shape index: {}]
  %s2 = inlined_call_operand.vmem [shape: f32[4], index: 2, kind: input, shape index: {}]
  %s3 = inlined_call_operand.hbm [shape: f32[8,256], index: 3, kind: output, shape index: {}]
  %s4 = sld [smem:[#allocation0]]
  $region34: #{tpu_custom_call.1} parent=0
    _
  %s6 = ssub.s32 1, %s4
  %s7 = scalar_select 0, %s6, %s4
  $region1: #{tpu_custom_call.1} parent=0
    #allocation2 [shape = 'u8[8192]{0}', space=vmem, size = 0x2000, scoped, tag = 'input window, operand 0, single buffered']
    #allocation3 [shape = 's32[1]{0}', space=sflag, size = 0x4, scoped, tag = 'scoped memory for tpu_custom_call.1']
    #allocation4 [shape = 's32[1]{0}', space=sflag, size = 0x4, scoped, tag = 'scoped memory for tpu_custom_call.1']
    #allocation5 [shape = 's32[1]{0}', space=sflag, size = 0x4, scoped, tag = 'scoped memory for tpu_custom_call.1']
    #allocation6 [shape = 's32[1]{0}', space=sflag, size = 0x4, scoped, tag = 'scoped memory for tpu_custom_call.1']
    #allocation7 [shape = 'u8[512]{0}', space=smem, size = 0x200, scoped, tag = 'input window, operand 1, single buffered']
    #allocation8 [shape = 'u8[512]{0}', space=smem, size = 0x200, scoped, tag = 'input window, operand 2, single buffered']
    #allocation9 [shape = 'u8[8192]{0}', space=vmem, size = 0x2000, scoped, tag = 'output window, operand 0, single buffered']
    %8 = vsyncpa [#allocation3], 0
    %9 = vsyncpa [#allocation5], 0
    %10 = vsyncpa [#allocation6], 0
    %11 = vsyncpa [#allocation4], 0
    // Predicated region
    $region2: #{tpu_custom_call.1} parent=1 // pred_check
      _
    $region3: #{tpu_custom_call.1} parent=1 // pred_check_branch
      %13 = sbr.rel (0) target = $region5
    $region4: #{tpu_custom_call.1} parent=1 // pred_region
      %15 = vsyncadd [#allocation3], 0
      %s17 = sshll.u32 %s0, 4
      %s18 = int_to_ptr.hbm [resolvable:$true] %s17
      %s19 = sshll.u32 [#allocation2], 4
      %s20 = int_to_ptr.vmem [resolvable:$true] %s19
      %22 = dma.hbm_to_vmem [thread:$0]  %s18, 256, %s20, [#allocation3]
    $region5: #{tpu_custom_call.1} parent=1 // pred_fallthru
      _
    // Predicated region
    $region6: #{tpu_custom_call.1} parent=1 // pred_check
      _
    $region7: #{tpu_custom_call.1} parent=1 // pred_check_branch
      %24 = sbr.rel (0) target = $region9
    $region8: #{tpu_custom_call.1} parent=1 // pred_region
      %26 = vsyncadd [#allocation5], 0
      %s28 = sshll.u32 %s1, 4
      %s29 = int_to_ptr.hbm [resolvable:$true] %s28
      %31 = dma.hbm_to_smem %s29, 16, [#allocation7], [#allocation5]
    $region9: #{tpu_custom_call.1} parent=1 // pred_fallthru
      _
    // Predicated region
    $region10: #{tpu_custom_call.1} parent=1 // pred_check
      _
    $region11: #{tpu_custom_call.1} parent=1 // pred_check_branch
      %33 = sbr.rel (0) target = $region13
    $region12: #{tpu_custom_call.1} parent=1 // pred_region
      %35 = vsyncadd [#allocation6], 0
      %s37 = sshll.u32 %s2, 4
      %s38 = int_to_ptr.vmem [resolvable:$true] %s37
      %40 = dma.vmem_to_smem %s38, 16, [#allocation8], [#allocation6]
    $region13: #{tpu_custom_call.1} parent=1 // pred_fallthru
      _
    // Predicated region
    $region14: #{tpu_custom_call.1} parent=1 // pred_check
      _
    $region15: #{tpu_custom_call.1} parent=1 // pred_check_branch
      %42 = sbr.rel (0) target = $region17
    $region16: #{tpu_custom_call.1} parent=1 // pred_region
      %44 = dma.done [#allocation3], 256
    $region17: #{tpu_custom_call.1} parent=1 // pred_fallthru
      _
    // Predicated region
    $region18: #{tpu_custom_call.1} parent=1 // pred_check
      _
    $region19: #{tpu_custom_call.1} parent=1 // pred_check_branch
      %46 = sbr.rel (0) target = $region21
    $region20: #{tpu_custom_call.1} parent=1 // pred_region
      %48 = dma.done [#allocation5], 16
    $region21: #{tpu_custom_call.1} parent=1 // pred_fallthru
      _
    // Predicated region
    $region22: #{tpu_custom_call.1} parent=1 // pred_check
      _
    $region23: #{tpu_custom_call.1} parent=1 // pred_check_branch
      %50 = sbr.rel (0) target = $region25
    $region24: #{tpu_custom_call.1} parent=1 // pred_region
      %52 = dma.done [#allocation6], 16
    $region25: #{tpu_custom_call.1} parent=1 // pred_fallthru
      _
    %53 = sfence
    %v54 = vld [vmem:[#allocation2] sm:$0xff]
    %v55 = vld [vmem:[#allocation2 + $0x8] sm:$0xff]
    %s56 = sld [smem:[#allocation7]]
    %v57 = vstv %s56
    %v58 = vmul.f32 %v57, %v54
    %v59 = vmul.f32 %v57, %v55
    %s60 = sld [smem:[#allocation7 + $0x1]]
    %v61 = vstv %s60
    %v62 = vmul.f32 %v61, %v54
    %v63 = vmul.f32 %v61, %v55
    %v66 = vrot.slane %v62, 1
    %v67 = vrot.slane %v63, 1
    %v70 = vadd.f32 %v58, %v66
    %v71 = vadd.f32 %v59, %v67
    %s72 = sld [smem:[#allocation7 + $0x2]]
    %v73 = vstv %s72
    %v74 = vmul.f32 %v73, %v54
    %v75 = vmul.f32 %v73, %v55
    %v78 = vrot.slane %v74, 2
    %v79 = vrot.slane %v75, 2
    %v82 = vadd.f32 %v70, %v78
    %v83 = vadd.f32 %v71, %v79
    %s84 = sld [smem:[#allocation7 + $0x3]]
    %v85 = vstv %s84
    %v86 = vmul.f32 %v85, %v54
    %v87 = vmul.f32 %v85, %v55
    %v90 = vrot.slane %v86, 3
    %v91 = vrot.slane %v87, 3
    %v94 = vadd.f32 %v82, %v90
    %v95 = vadd.f32 %v83, %v91
    %s96 = sld [smem:[#allocation8]]
    %v97 = vstv %s96
    %v98 = vadd.f32 %v94, %v97
    %v99 = vadd.f32 %v95, %v97
    %v102 = vrot.slane %v99, 7
    %vm103 = vcmask 1040384
    %v104 = vsel %vm103, %v98, %v102
    %v106 = vlaneseq
    %vm107 = vcmp.ge.s32.totalorder %v106, 0
    %vm108 = vcmp.lt.s32.totalorder %v106, 256
    %vm109 = vmand %vm107, %vm108
    %110 = vst.msk [vmem:[#allocation9] ss:$8 sm:$0x3] %vm109, %v104
    %111 = vst.msk [vmem:[#allocation9] ss:$8 sm:$0x0] %vm109, %v104
    %s112 = sld [smem:[#allocation7 + $0x4]]
    %v113 = vstv %s112
    %v114 = vmul.f32 %v113, %v54
    %v115 = vmul.f32 %v113, %v55
    %s116 = sld [smem:[#allocation7 + $0x5]]
    %v117 = vstv %s116
    %v118 = vmul.f32 %v117, %v54
    %v119 = vmul.f32 %v117, %v55
    %v122 = vrot.slane %v118, 1
    %v123 = vrot.slane %v119, 1
    %v126 = vadd.f32 %v114, %v122
    %v127 = vadd.f32 %v115, %v123
    %s128 = sld [smem:[#allocation7 + $0x6]]
    %v129 = vstv %s128
    %v130 = vmul.f32 %v129, %v54
    %v131 = vmul.f32 %v129, %v55
    %v134 = vrot.slane %v130, 2
    %v135 = vrot.slane %v131, 2
    %v138 = vadd.f32 %v126, %v134
    %v139 = vadd.f32 %v127, %v135
    %s140 = sld [smem:[#allocation7 + $0x7]]
    %v141 = vstv %s140
    %v142 = vmul.f32 %v141, %v54
    %v143 = vmul.f32 %v141, %v55
    %v146 = vrot.slane %v142, 3
    %v147 = vrot.slane %v143, 3
    %v150 = vadd.f32 %v138, %v146
    %v151 = vadd.f32 %v139, %v147
    %s152 = sld [smem:[#allocation8 + $0x1]]
    %v153 = vstv %s152
    %v154 = vadd.f32 %v150, %v153
    %v155 = vadd.f32 %v151, %v153
    %v158 = vrot.slane %v155, 7
    %v159 = vsel %vm103, %v154, %v158
    %s161 = scalar_lea.vmem [#allocation9], 1
    %162 = vst.msk [vmem:[%s161] ss:$8 sm:$0x3] %vm109, %v159
    %163 = vst.msk [vmem:[%s161] ss:$8 sm:$0x0] %vm109, %v159
    %s164 = sld [smem:[#allocation7 + $0x8]]
    %v165 = vstv %s164
    %v166 = vmul.f32 %v165, %v54
    %v167 = vmul.f32 %v165, %v55
    %s168 = sld [smem:[#allocation7 + $0x9]]
    %v169 = vstv %s168
    %v170 = vmul.f32 %v169, %v54
    %v171 = vmul.f32 %v169, %v55
    %v174 = vrot.slane %v170, 1
    %v175 = vrot.slane %v171, 1
    %v178 = vadd.f32 %v166, %v174
    %v179 = vadd.f32 %v167, %v175
    %s180 = sld [smem:[#allocation7 + $0xa]]
    %v181 = vstv %s180
    %v182 = vmul.f32 %v181, %v54
    %v183 = vmul.f32 %v181, %v55
    %v186 = vrot.slane %v182, 2
    %v187 = vrot.slane %v183, 2
    %v190 = vadd.f32 %v178, %v186
    %v191 = vadd.f32 %v179, %v187
    %s192 = sld [smem:[#allocation7 + $0xb]]
    %v193 = vstv %s192
    %v194 = vmul.f32 %v193, %v54
    %v195 = vmul.f32 %v193, %v55
    %v198 = vrot.slane %v194, 3
    %v199 = vrot.slane %v195, 3
    %v202 = vadd.f32 %v190, %v198
    %v203 = vadd.f32 %v191, %v199
    %s204 = sld [smem:[#allocation8 + $0x2]]
    %v205 = vstv %s204
    %v206 = vadd.f32 %v202, %v205
    %v207 = vadd.f32 %v203, %v205
    %v210 = vrot.slane %v207, 7
    %v211 = vsel %vm103, %v206, %v210
    %s213 = scalar_lea.vmem [#allocation9], 2
    %214 = vst.msk [vmem:[%s213] ss:$8 sm:$0x3] %vm109, %v211
    %215 = vst.msk [vmem:[%s213] ss:$8 sm:$0x0] %vm109, %v211
    %s216 = sld [smem:[#allocation7 + $0xc]]
    %v217 = vstv %s216
    %v218 = vmul.f32 %v217, %v54
    %v219 = vmul.f32 %v217, %v55
    %s220 = sld [smem:[#allocation7 + $0xd]]
    %v221 = vstv %s220
    %v222 = vmul.f32 %v221, %v54
    %v223 = vmul.f32 %v221, %v55
    %v226 = vrot.slane %v222, 1
    %v227 = vrot.slane %v223, 1
    %v230 = vadd.f32 %v218, %v226
    %v231 = vadd.f32 %v219, %v227
    %s232 = sld [smem:[#allocation7 + $0xe]]
    %v233 = vstv %s232
    %v234 = vmul.f32 %v233, %v54
    %v235 = vmul.f32 %v233, %v55
    %v238 = vrot.slane %v234, 2
    %v239 = vrot.slane %v235, 2
    %v242 = vadd.f32 %v230, %v238
    %v243 = vadd.f32 %v231, %v239
    %s244 = sld [smem:[#allocation7 + $0xf]]
    %v245 = vstv %s244
    %v246 = vmul.f32 %v245, %v54
    %v247 = vmul.f32 %v245, %v55
    %v250 = vrot.slane %v246, 3
    %v251 = vrot.slane %v247, 3
    %v254 = vadd.f32 %v242, %v250
    %v255 = vadd.f32 %v243, %v251
    %s256 = sld [smem:[#allocation8 + $0x3]]
    %v257 = vstv %s256
    %v258 = vadd.f32 %v254, %v257
    %v259 = vadd.f32 %v255, %v257
    %v262 = vrot.slane %v259, 7
    %v263 = vsel %vm103, %v258, %v262
    %s265 = scalar_lea.vmem [#allocation9], 3
    %266 = vst.msk [vmem:[%s265] ss:$8 sm:$0x3] %vm109, %v263
    %267 = vst.msk [vmem:[%s265] ss:$8 sm:$0x0] %vm109, %v263
    %s268 = sld [smem:[#allocation7]]
    %v269 = vstv %s268
    %v270 = vmul.f32 %v269, %v54
    %v271 = vmul.f32 %v269, %v55
    %s272 = sld [smem:[#allocation7 + $0x1]]
    %v273 = vstv %s272
    %v274 = vmul.f32 %v273, %v54
    %v275 = vmul.f32 %v273, %v55
    %v278 = vrot.slane %v274, 1
    %v279 = vrot.slane %v275, 1
    %v282 = vadd.f32 %v270, %v278
    %v283 = vadd.f32 %v271, %v279
    %s284 = sld [smem:[#allocation7 + $0x2]]
    %v285 = vstv %s284
    %v286 = vmul.f32 %v285, %v54
    %v287 = vmul.f32 %v285, %v55
    %v290 = vrot.slane %v286, 2
    %v291 = vrot.slane %v287, 2
    %v294 = vadd.f32 %v282, %v290
    %v295 = vadd.f32 %v283, %v291
    %s296 = sld [smem:[#allocation7 + $0x3]]
    %v297 = vstv %s296
    %v298 = vmul.f32 %v297, %v54
    %v299 = vmul.f32 %v297, %v55
    %v302 = vrot.slane %v298, 3
    %v303 = vrot.slane %v299, 3
    %v306 = vadd.f32 %v294, %v302
    %v307 = vadd.f32 %v295, %v303
    %s308 = sld [smem:[#allocation8]]
    %v309 = vstv %s308
    %v310 = vadd.f32 %v306, %v309
    %v311 = vadd.f32 %v307, %v309
    %314 = vst [vmem:[#allocation1] sm:$0xff] %v310
    %315 = vst [vmem:[#allocation1 + $0x9] sm:$0xff] %v311
    %s316 = scalar_lea.vmem [#allocation1], 4
    %v317 = vld [vmem:[%s316] ss:$9 sm:$0xff]
    %s319 = scalar_lea.vmem [#allocation9], 4
    %320 = vst.msk [vmem:[%s319] ss:$8 sm:$0x3] %vm109, %v317
    %321 = vst.msk [vmem:[%s319] ss:$8 sm:$0x0] %vm109, %v317
    %s322 = sld [smem:[#allocation7 + $0x4]]
    %v323 = vstv %s322
    %v324 = vmul.f32 %v323, %v54
    %v325 = vmul.f32 %v323, %v55
    %s326 = sld [smem:[#allocation7 + $0x5]]
    %v327 = vstv %s326
    %v328 = vmul.f32 %v327, %v54
    %v329 = vmul.f32 %v327, %v55
    %v332 = vrot.slane %v328, 1
    %v333 = vrot.slane %v329, 1
    %v336 = vadd.f32 %v324, %v332
    %v337 = vadd.f32 %v325, %v333
    %s338 = sld [smem:[#allocation7 + $0x6]]
    %v339 = vstv %s338
    %v340 = vmul.f32 %v339, %v54
    %v341 = vmul.f32 %v339, %v55
    %v344 = vrot.slane %v340, 2
    %v345 = vrot.slane %v341, 2
    %v348 = vadd.f32 %v336, %v344
    %v349 = vadd.f32 %v337, %v345
    %s350 = sld [smem:[#allocation7 + $0x7]]
    %v351 = vstv %s350
    %v352 = vmul.f32 %v351, %v54
    %v353 = vmul.f32 %v351, %v55
    %v356 = vrot.slane %v352, 3
    %v357 = vrot.slane %v353, 3
    %v360 = vadd.f32 %v348, %v356
    %v361 = vadd.f32 %v349, %v357
    %s362 = sld [smem:[#allocation8 + $0x1]]
    %v363 = vstv %s362
    %v364 = vadd.f32 %v360, %v363
    %v365 = vadd.f32 %v361, %v363
    %368 = vst [vmem:[#allocation1] sm:$0xff] %v364
    %369 = vst [vmem:[#allocation1 + $0x9] sm:$0xff] %v365
    %s370 = scalar_lea.vmem [#allocation1], 4
    %v371 = vld [vmem:[%s370] ss:$9 sm:$0xff]
    %s373 = scalar_lea.vmem [#allocation9], 5
    %374 = vst.msk [vmem:[%s373] ss:$8 sm:$0x3] %vm109, %v371
    %375 = vst.msk [vmem:[%s373] ss:$8 sm:$0x0] %vm109, %v371
    %s376 = sld [smem:[#allocation7 + $0x8]]
    %v377 = vstv %s376
    %v378 = vmul.f32 %v377, %v54
    %v379 = vmul.f32 %v377, %v55
    %s380 = sld [smem:[#allocation7 + $0x9]]
    %v381 = vstv %s380
    %v382 = vmul.f32 %v381, %v54
    %v383 = vmul.f32 %v381, %v55
    %v386 = vrot.slane %v382, 1
    %v387 = vrot.slane %v383, 1
    %v390 = vadd.f32 %v378, %v386
    %v391 = vadd.f32 %v379, %v387
    %s392 = sld [smem:[#allocation7 + $0xa]]
    %v393 = vstv %s392
    %v394 = vmul.f32 %v393, %v54
    %v395 = vmul.f32 %v393, %v55
    %v398 = vrot.slane %v394, 2
    %v399 = vrot.slane %v395, 2
    %v402 = vadd.f32 %v390, %v398
    %v403 = vadd.f32 %v391, %v399
    %s404 = sld [smem:[#allocation7 + $0xb]]
    %v405 = vstv %s404
    %v406 = vmul.f32 %v405, %v54
    %v407 = vmul.f32 %v405, %v55
    %v410 = vrot.slane %v406, 3
    %v411 = vrot.slane %v407, 3
    %v414 = vadd.f32 %v402, %v410
    %v415 = vadd.f32 %v403, %v411
    %s416 = sld [smem:[#allocation8 + $0x2]]
    %v417 = vstv %s416
    %v418 = vadd.f32 %v414, %v417
    %v419 = vadd.f32 %v415, %v417
    %422 = vst [vmem:[#allocation1] sm:$0xff] %v418
    %423 = vst [vmem:[#allocation1 + $0x9] sm:$0xff] %v419
    %s424 = scalar_lea.vmem [#allocation1], 4
    %v425 = vld [vmem:[%s424] ss:$9 sm:$0xff]
    %s427 = scalar_lea.vmem [#allocation9], 6
    %428 = vst.msk [vmem:[%s427] ss:$8 sm:$0x3] %vm109, %v425
    %429 = vst.msk [vmem:[%s427] ss:$8 sm:$0x0] %vm109, %v425
    %s430 = sld [smem:[#allocation7 + $0xc]]
    %v431 = vstv %s430
    %v432 = vmul.f32 %v431, %v54
    %v433 = vmul.f32 %v431, %v55
    %s434 = sld [smem:[#allocation7 + $0xd]]
    %v435 = vstv %s434
    %v436 = vmul.f32 %v435, %v54
    %v437 = vmul.f32 %v435, %v55
    %v440 = vrot.slane %v436, 1
    %v441 = vrot.slane %v437, 1
    %v444 = vadd.f32 %v432, %v440
    %v445 = vadd.f32 %v433, %v441
    %s446 = sld [smem:[#allocation7 + $0xe]]
    %v447 = vstv %s446
    %v448 = vmul.f32 %v447, %v54
    %v449 = vmul.f32 %v447, %v55
    %v452 = vrot.slane %v448, 2
    %v453 = vrot.slane %v449, 2
    %v456 = vadd.f32 %v444, %v452
    %v457 = vadd.f32 %v445, %v453
    %s458 = sld [smem:[#allocation7 + $0xf]]
    %v459 = vstv %s458
    %v460 = vmul.f32 %v459, %v54
    %v461 = vmul.f32 %v459, %v55
    %v464 = vrot.slane %v460, 3
    %v465 = vrot.slane %v461, 3
    %v468 = vadd.f32 %v456, %v464
    %v469 = vadd.f32 %v457, %v465
    %s470 = sld [smem:[#allocation8 + $0x3]]
    %v471 = vstv %s470
    %v472 = vadd.f32 %v468, %v471
    %v473 = vadd.f32 %v469, %v471
    %476 = vst [vmem:[#allocation1] sm:$0xff] %v472
    %477 = vst [vmem:[#allocation1 + $0x9] sm:$0xff] %v473
    %s478 = scalar_lea.vmem [#allocation1], 4
    %v479 = vld [vmem:[%s478] ss:$9 sm:$0xff]
    %s481 = scalar_lea.vmem [#allocation9], 7
    %482 = vst.msk [vmem:[%s481] ss:$8 sm:$0x3] %vm109, %v479
    %483 = vst.msk [vmem:[%s481] ss:$8 sm:$0x0] %vm109, %v479
    // Predicated region
    $region26: #{tpu_custom_call.1} parent=1 // pred_check
      _
    $region27: #{tpu_custom_call.1} parent=1 // pred_check_branch
      %485 = sbr.rel (0) target = $region29
    $region28: #{tpu_custom_call.1} parent=1 // pred_region
      %487 = vsyncadd [#allocation4], 0
      %s489 = sshll.u32 [#allocation9], 4
      %s490 = int_to_ptr.vmem [resolvable:$true] %s489
      %s491 = sshll.u32 %s3, 4
      %s492 = int_to_ptr.hbm [resolvable:$true] %s491
      %494 = dma.vmem_to_hbm [thread:$0]  %s490, 256, %s492, [#allocation4]
    $region29: #{tpu_custom_call.1} parent=1 // pred_fallthru
      _
    // Predicated region
    $region30: #{tpu_custom_call.1} parent=1 // pred_check
      _
    $region31: #{tpu_custom_call.1} parent=1 // pred_check_branch
      %496 = sbr.rel (0) target = $region33
    $region32: #{tpu_custom_call.1} parent=1 // pred_region
      %498 = dma.done [#allocation4], 256
    $region33: #{tpu_custom_call.1} parent=1 // pred_fallthru
      _
    %499 = vsyncpa [#allocation3], 1
    %500 = vsyncpa [#allocation4], 1
    %501 = vsyncpa [#allocation5], 1
    %502 = vsyncpa [#allocation6], 1

</llo_original>
